<compile_context>
chip_gen: v5e
topology: v5e:2x2
jax: 0.10.0
libtpu: 0.0.40
codegen_flags: <defaults>
</compile_context>

<pallas_src>
import functools

import jax
import jax.numpy as jnp
from jax.experimental import pallas as pl
from jax.experimental.pallas import tpu as pltpu


# ----------------------------------------------------------------------------
# Pallas kernel: forward + softmax-entropy grad + SGD step (one adapt step)
# ----------------------------------------------------------------------------
def _tent_step_kernel(x_ref, w_ref, b_ref, out_ref, w_new_ref, b_new_ref,
                      gw_acc, gb_acc, *, lr, inv_n):
    i = pl.program_id(0)
    n_tiles = pl.num_programs(0)

    @pl.when(i == 0)
    def _init():
        gw_acc[...] = jnp.zeros_like(gw_acc)
        gb_acc[...] = jnp.zeros_like(gb_acc)

    x = x_ref[...]                                     # (TN, D) bf16
    w = w_ref[...]                                     # (C, D)  f32 master
    b = b_ref[...]                                     # (1, C)  f32

    # ---- model forward: z = x @ W^T + b  (bf16 MXU inputs, f32 accumulate) --
    z = jax.lax.dot_general(
        x, w.astype(jnp.bfloat16),
        dimension_numbers=(((1,), (1,)), ((), ())),
        preferred_element_type=jnp.float32) + b        # (TN, C) f32

    # ---- softmax_entropy(z) = -(softmax(z) * log_softmax(z)).sum(1) --------
    m = jnp.max(z, axis=-1, keepdims=True)
    e = jnp.exp(z - m)
    s = jnp.sum(e, axis=-1, keepdims=True)
    p = e * pl.reciprocal(s, approx=True)              # softmax (EUP recip)
    logp = (z - m) - jnp.log(s)                        # log_softmax
    ent = -jnp.sum(p * logp, axis=-1, keepdims=True)   # (TN, 1)

    # ---- analytic backward of L = mean_n entropy:  dL/dz -------------------
    dz = (p * (logp + ent)) * (-inv_n)                 # (TN, C) f32

    # Grads in the lane-dense transposed layout: gW (C, D), gb (1, C).
    gw_acc[...] += jax.lax.dot_general(
        dz.astype(jnp.bfloat16), x,
        dimension_numbers=(((0,), (0,)), ((), ())),
        preferred_element_type=jnp.float32)            # (C, D)
    gb_acc[...] += jnp.sum(dz, axis=0, keepdims=True)  # (1, C)

    # Tent returns the logits computed BEFORE this step's parameter update.
    out_ref[...] = z

    # ---- SGD step (optimizer.step(); zero_grad implicit) on the last tile --
    @pl.when(i == n_tiles - 1)
    def _apply():
        w_new_ref[...] = w - lr * gw_acc[...]
        b_new_ref[...] = b - lr * gb_acc[...]


def _pick_batch_tile(n):
    # Largest MXU-friendly batch tile (sublane multiple of 8) that evenly
    # divides N; fall back to the full batch when it is small or indivisible.
    for t in (256, 128, 64, 32, 16, 8):
        if n % t == 0:
            return t
    return n


@functools.partial(jax.jit, static_argnames=("lr",), donate_argnums=(1, 2))
def tent_step(x_flat, w, b, lr):
    """One forward_and_adapt step. Returns (logits, w_new, b_new)."""
    n, d = x_flat.shape
    c = w.shape[0]
    tn = _pick_batch_tile(n)
    grid = (n // tn,)

    kernel = functools.partial(_tent_step_kernel, lr=lr, inv_n=1.0 / n)
    cost = pl.CostEstimate(
        flops=4 * n * d * c + 12 * n * c,
        transcendentals=2 * n * c + 2 * n,
        bytes_accessed=(n * d * x_flat.dtype.itemsize + 2 * c * d * 4
                        + 2 * c * 4 + n * c * 4),
    )

    return pl.pallas_call(
        kernel,
        grid=grid,
        in_specs=[
            pl.BlockSpec((tn, d), lambda i: (i, 0)),   # x tile (pipelined DMA)
            pl.BlockSpec((c, d), lambda i: (0, 0)),    # W resident across grid
            pl.BlockSpec((1, c), lambda i: (0, 0)),    # b resident
        ],
        out_specs=(
            pl.BlockSpec((tn, c), lambda i: (i, 0)),   # logits per batch tile
            pl.BlockSpec((c, d), lambda i: (0, 0)),    # updated W (written last)
            pl.BlockSpec((1, c), lambda i: (0, 0)),    # updated b (written last)
        ),
        out_shape=(
            jax.ShapeDtypeStruct((n, c), jnp.float32),
            jax.ShapeDtypeStruct((c, d), jnp.float32),
            jax.ShapeDtypeStruct((1, c), jnp.float32),
        ),
        scratch_shapes=[
            pltpu.VMEM((c, d), jnp.float32),           # grad-W accumulator
            pltpu.VMEM((1, c), jnp.float32),           # grad-b accumulator
        ],
        # In-place SGD update: the W/b inputs alias the updated outputs (P8).
        input_output_aliases={1: 1, 2: 2},
        compiler_params=pltpu.CompilerParams(
            # gW/gb accumulate across batch tiles -> reduction axis.
            # TODO(synk): on v7x (2 TCs) a D-split of the gW accumulation with
            # per-core partials could be marked "parallel" for ~2x matmul.
            dimension_semantics=("arbitrary",),
            vmem_limit_bytes=32 * 1024 * 1024),
        cost_estimate=cost,
    )(x_flat, w, b)


# ----------------------------------------------------------------------------
# Tent wrapper (functional param state; mirrors the nn.Module semantics)
# ----------------------------------------------------------------------------
class Tent:
    """Tent adapts the wrapped linear model by entropy minimization.

    Params are stored in nn.Linear layout W:(num_classes, features),
    b:(1, num_classes) so the weight tensor is lane-dense in the kernel.
    """

    def __init__(self, w, b, lr=0.01, steps=1, episodic=False):
        assert steps > 0, "tent requires >= 1 step(s) to forward and update"
        # Private copies: the adaptation step donates/aliases its param
        # buffers, so never hand the caller's arrays to the kernel.
        self.w = jnp.array(w, dtype=jnp.float32)
        self.b = jnp.array(b, dtype=jnp.float32).reshape(1, -1)
        self.lr = float(lr)
        self.steps = int(steps)
        self.episodic = episodic
        # copy_model_and_optimizer(): snapshot param state for reset().
        self.model_state = (jnp.copy(self.w), jnp.copy(self.b))
        # TODO(synk): plain SGD has no optimizer state to snapshot/restore.

    def reset(self):
        if self.model_state is None:
            raise Exception("cannot reset without saved model/optimizer state")
        w, b = self.model_state
        # Fresh copies so the saved snapshot never gets donated into a kernel.
        self.w, self.b = jnp.copy(w), jnp.copy(b)

    def forward(self, x_nchw):
        if self.episodic:
            self.reset()
        n = x_nchw.shape[0]
        # NCHW -> (N, C*H*W) row-major (torch .view(N, -1)); activations cast
        # to bf16 once (halves x DMA traffic; matmuls accumulate in f32).
        x_flat = x_nchw.reshape(n, -1).astype(jnp.bfloat16)
        outputs = None
        # TODO(synk): for steps > 1 the loop could be folded into the kernel
        # grid to keep W/b VMEM-resident across steps; x_flat is already
        # device-resident across this Python loop.
        for _ in range(self.steps):
            outputs, self.w, self.b = tent_step(x_flat, self.w, self.b,
                                                lr=self.lr)
        return outputs

    __call__ = forward


# ----------------------------------------------------------------------------
# Pure-JAX f32 reference (for correctness check)
# ----------------------------------------------------------------------------
def _ref_step(x, w, b, lr):
    def mean_entropy(w_, b_):
        z_ = x @ w_.T + b_
        p_ = jax.nn.softmax(z_, axis=1)
        logp_ = jax.nn.log_softmax(z_, axis=1)
        return -(p_ * logp_).sum(1).mean(0)

    z = x @ w.T + b
    gw, gb = jax.grad(mean_entropy, argnums=(0, 1))(w, b)
    return z, w - lr * gw, b - lr * gb


if __name__ == "__main__":
    key = jax.random.PRNGKey(0)
    kx, kw, kb = jax.random.split(key, 3)

    N, C_in, H, W = 2, 4, 16, 16          # input batch: NCHW
    D = C_in * H * W                      # 1024 flattened features
    NUM_CLASSES = 16

    x = jax.random.normal(kx, (N, C_in, H, W), dtype=jnp.float32)
    # nn.Linear layout: weight (out_features, in_features) -> lane-dense D.
    w0 = jax.random.normal(kw, (NUM_CLASSES, D), dtype=jnp.float32) * 0.02
    b0 = jax.random.normal(kb, (1, NUM_CLASSES), dtype=jnp.float32) * 0.02

    tent = Tent(w0, b0, lr=0.01, steps=1, episodic=False)
    outputs = jax.block_until_ready(tent.forward(x))
    w_new = jax.block_until_ready(tent.w)
    b_new = jax.block_until_ready(tent.b)

    # Correctness vs a pure-f32 JAX reference.  The kernel uses bf16 MXU
    # inputs with f32 accumulation, so logits get a bf16-scale tolerance; the
    # parameter updates are lr*grad-sized perturbations and stay tight.
    x_flat = x.reshape(N, -1)
    z_ref, w_refv, b_refv = _ref_step(x_flat, w0, b0, 0.01)
    assert jnp.allclose(outputs, z_ref, atol=5e-2, rtol=5e-2), "logits mismatch"
    assert jnp.allclose(w_new, w_refv, atol=2e-4, rtol=2e-3), "W update mismatch"
    assert jnp.allclose(b_new, b_refv, atol=2e-4, rtol=2e-3), "b update mismatch"

    print("KERNEL_OK")
</pallas_src>

<mosaic_0001>
module attributes {stable_mosaic.version = 11 : i64} {
  func.func @_tent_step_kernel(%arg0: i32, %arg1: memref<2x1024xbf16, #tpu.memory_space<vmem>>, %arg2: memref<16x1024xf32, #tpu.memory_space<vmem>>, %arg3: memref<1x16xf32, #tpu.memory_space<vmem>>, %arg4: memref<2x16xf32, #tpu.memory_space<vmem>>, %arg5: memref<16x1024xf32, #tpu.memory_space<vmem>>, %arg6: memref<1x16xf32, #tpu.memory_space<vmem>>, %arg7: memref<16x1024xf32, #tpu.memory_space<vmem>>, %arg8: memref<1x16xf32, #tpu.memory_space<vmem>>) attributes {dimension_semantics = [#tpu.dimension_semantics<arbitrary>], iteration_bounds = array<i64: 1>, scalar_prefetch = 0 : i64, scratch_operands = 2 : i64, tpu.core_type = #tpu.core_type<tc>, window_params = [{transform_indices = @transform_0, window_bounds = array<i64: 2, 1024>}, {pipeline_mode = #tpu.pipeline_mode<synchronous>, transform_indices = @transform_1, window_bounds = array<i64: 16, 1024>}, {pipeline_mode = #tpu.pipeline_mode<synchronous>, transform_indices = @transform_2, window_bounds = array<i64: 1, 16>}, {transform_indices = @transform_3, window_bounds = array<i64: 2, 16>}, {pipeline_mode = #tpu.pipeline_mode<synchronous>, transform_indices = @transform_4, window_bounds = array<i64: 16, 1024>}, {pipeline_mode = #tpu.pipeline_mode<synchronous>, transform_indices = @transform_5, window_bounds = array<i64: 1, 16>}]} {
    %c0_i32 = arith.constant 0 : i32
    %0 = arith.cmpi eq, %arg0, %c0_i32 : i32
    %1 = arith.extui %0 : i1 to i32
    %c0_i32_0 = arith.constant 0 : i32
    %2 = arith.cmpi ne, %1, %c0_i32_0 : i32
    scf.if %2 {
      %cst_25 = arith.constant 0.000000e+00 : f32
      %49 = vector.broadcast %cst_25 : f32 to vector<16x1024xf32>
      %c0_26 = arith.constant 0 : index
      %c0_27 = arith.constant 0 : index
      %50 = vector.load %arg7[%c0_26, %c0_27] : memref<16x1024xf32, #tpu.memory_space<vmem>>, vector<16x1024xf32>
      tpu.vector_store %arg7[%c0_26, %c0_27], %49 {strides = array<i32>} : memref<16x1024xf32, #tpu.memory_space<vmem>>, vector<16x1024xf32>,
      %cst_28 = arith.constant 0.000000e+00 : f32
      %51 = vector.broadcast %cst_28 : f32 to vector<1x16xf32>
      %c0_29 = arith.constant 0 : index
      %c0_30 = arith.constant 0 : index
      %52 = vector.load %arg8[%c0_29, %c0_30] : memref<1x16xf32, #tpu.memory_space<vmem>>, vector<1x16xf32>
      tpu.vector_store %arg8[%c0_29, %c0_30], %51 {strides = array<i32>} : memref<1x16xf32, #tpu.memory_space<vmem>>, vector<1x16xf32>,
    } else {
    }
    %c0 = arith.constant 0 : index
    %c0_1 = arith.constant 0 : index
    %3 = vector.load %arg1[%c0, %c0_1] : memref<2x1024xbf16, #tpu.memory_space<vmem>>, vector<2x1024xbf16>
    %c0_2 = arith.constant 0 : index
    %c0_3 = arith.constant 0 : index
    %4 = vector.load %arg2[%c0_2, %c0_3] : memref<16x1024xf32, #tpu.memory_space<vmem>>, vector<16x1024xf32>
    %c0_4 = arith.constant 0 : index
    %c0_5 = arith.constant 0 : index
    %5 = vector.load %arg3[%c0_4, %c0_5] : memref<1x16xf32, #tpu.memory_space<vmem>>, vector<1x16xf32>
    %6 = arith.truncf %4 : vector<16x1024xf32> to vector<16x1024xbf16>
    %cst = arith.constant dense<0.000000e+00> : vector<2x16xf32>
    %7 = tpu.matmul %3, %6, %cst {dimension_numbers = #tpu.dot_dimension_numbers<[1], [1], [0], [0], [0, 0, 1, 0], [], []>} : vector<2x1024xbf16>, vector<16x1024xbf16>, vector<2x16xf32> -> vector<2x16xf32>
    %8 = vector.broadcast %5 : vector<1x16xf32> to vector<2x16xf32>
    %9 = arith.addf %7, %8 : vector<2x16xf32>
    %cst_6 = arith.constant dense<0xFF800000> : vector<2xf32>
    %10 = vector.multi_reduction <maximumf>, %9, %cst_6 [1] : vector<2x16xf32> to vector<2xf32>
    %11 = vector.shape_cast %10 : vector<2xf32> to vector<2x1xf32>
    %12 = vector.broadcast %11 : vector<2x1xf32> to vector<2x16xf32>
    %13 = arith.subf %9, %12 : vector<2x16xf32>
    %14 = math.exp %13 : vector<2x16xf32>
    %cst_7 = arith.constant dense<0.000000e+00> : vector<2xf32>
    %15 = vector.multi_reduction <add>, %14, %cst_7 [1] : vector<2x16xf32> to vector<2xf32>
    %16 = vector.shape_cast %15 : vector<2xf32> to vector<2x1xf32>
    %17 = tpu.reciprocal %16 {approx = true} : vector<2x1xf32> -> vector<2x1xf32>
    %18 = vector.broadcast %17 : vector<2x1xf32> to vector<2x16xf32>
    %19 = arith.mulf %14, %18 : vector<2x16xf32>
    %20 = vector.broadcast %11 : vector<2x1xf32> to vector<2x16xf32>
    %21 = arith.subf %9, %20 : vector<2x16xf32>
    %22 = math.log %16 : vector<2x1xf32>
    %23 = vector.broadcast %22 : vector<2x1xf32> to vector<2x16xf32>
    %24 = arith.subf %21, %23 : vector<2x16xf32>
    %25 = arith.mulf %19, %24 : vector<2x16xf32>
    %cst_8 = arith.constant dense<0.000000e+00> : vector<2xf32>
    %26 = vector.multi_reduction <add>, %25, %cst_8 [1] : vector<2x16xf32> to vector<2xf32>
    %27 = vector.shape_cast %26 : vector<2xf32> to vector<2x1xf32>
    %cst_9 = arith.constant 0.000000e+00 : f32
    %28 = vector.broadcast %cst_9 : f32 to vector<2x1xf32>
    %29 = arith.subf %28, %27 : vector<2x1xf32>
    %30 = vector.broadcast %29 : vector<2x1xf32> to vector<2x16xf32>
    %31 = arith.addf %24, %30 : vector<2x16xf32>
    %32 = arith.mulf %19, %31 : vector<2x16xf32>
    %cst_10 = arith.constant -5.000000e-01 : f32
    %33 = vector.broadcast %cst_10 : f32 to vector<2x16xf32>
    %34 = arith.mulf %32, %33 : vector<2x16xf32>
    %c0_11 = arith.constant 0 : index
    %c0_12 = arith.constant 0 : index
    %35 = vector.load %arg7[%c0_11, %c0_12] : memref<16x1024xf32, #tpu.memory_space<vmem>>, vector<16x1024xf32>
    %36 = arith.truncf %34 : vector<2x16xf32> to vector<2x16xbf16>
    %cst_13 = arith.constant dense<0.000000e+00> : vector<16x1024xf32>
    %37 = tpu.matmul %36, %3, %cst_13 {dimension_numbers = #tpu.dot_dimension_numbers<[0], [0], [1], [1], [0, 1, 1, 1], [], []>} : vector<2x16xbf16>, vector<2x1024xbf16>, vector<16x1024xf32> -> vector<16x1024xf32>
    %38 = arith.addf %35, %37 : vector<16x1024xf32>
    %c0_14 = arith.constant 0 : index
    %c0_15 = arith.constant 0 : index
    %39 = vector.load %arg7[%c0_14, %c0_15] : memref<16x1024xf32, #tpu.memory_space<vmem>>, vector<16x1024xf32>
    tpu.vector_store %arg7[%c0_14, %c0_15], %38 {strides = array<i32>} : memref<16x1024xf32, #tpu.memory_space<vmem>>, vector<16x1024xf32>,
    %c0_16 = arith.constant 0 : index
    %c0_17 = arith.constant 0 : index
    %40 = vector.load %arg8[%c0_16, %c0_17] : memref<1x16xf32, #tpu.memory_space<vmem>>, vector<1x16xf32>
    %cst_18 = arith.constant dense<0.000000e+00> : vector<16xf32>
    %41 = vector.multi_reduction <add>, %34, %cst_18 [0] : vector<2x16xf32> to vector<16xf32>
    %42 = vector.shape_cast %41 : vector<16xf32> to vector<1x16xf32>
    %43 = arith.addf %40, %42 : vector<1x16xf32>
    %c0_19 = arith.constant 0 : index
    %c0_20 = arith.constant 0 : index
    %44 = vector.load %arg8[%c0_19, %c0_20] : memref<1x16xf32, #tpu.memory_space<vmem>>, vector<1x16xf32>
    tpu.vector_store %arg8[%c0_19, %c0_20], %43 {strides = array<i32>} : memref<1x16xf32, #tpu.memory_space<vmem>>, vector<1x16xf32>,
    %c0_21 = arith.constant 0 : index
    %c0_22 = arith.constant 0 : index
    %45 = vector.load %arg4[%c0_21, %c0_22] : memref<2x16xf32, #tpu.memory_space<vmem>>, vector<2x16xf32>
    tpu.vector_store %arg4[%c0_21, %c0_22], %9 {strides = array<i32>} : memref<2x16xf32, #tpu.memory_space<vmem>>, vector<2x16xf32>,
    %c0_i32_23 = arith.constant 0 : i32
    %46 = arith.cmpi eq, %arg0, %c0_i32_23 : i32
    %47 = arith.extui %46 : i1 to i32
    %c0_i32_24 = arith.constant 0 : i32
    %48 = arith.cmpi ne, %47, %c0_i32_24 : i32
    scf.if %48 {
      %c0_25 = arith.constant 0 : index
      %c0_26 = arith.constant 0 : index
      %49 = vector.load %arg7[%c0_25, %c0_26] : memref<16x1024xf32, #tpu.memory_space<vmem>>, vector<16x1024xf32>
      %cst_27 = arith.constant 0.00999999977 : f32
      %50 = vector.broadcast %cst_27 : f32 to vector<16x1024xf32>
      %51 = arith.mulf %50, %49 : vector<16x1024xf32>
      %52 = arith.subf %4, %51 : vector<16x1024xf32>
      %c0_28 = arith.constant 0 : index
      %c0_29 = arith.constant 0 : index
      %53 = vector.load %arg5[%c0_28, %c0_29] : memref<16x1024xf32, #tpu.memory_space<vmem>>, vector<16x1024xf32>
      tpu.vector_store %arg5[%c0_28, %c0_29], %52 {strides = array<i32>} : memref<16x1024xf32, #tpu.memory_space<vmem>>, vector<16x1024xf32>,
      %c0_30 = arith.constant 0 : index
      %c0_31 = arith.constant 0 : index
      %54 = vector.load %arg8[%c0_30, %c0_31] : memref<1x16xf32, #tpu.memory_space<vmem>>, vector<1x16xf32>
      %cst_32 = arith.constant 0.00999999977 : f32
      %55 = vector.broadcast %cst_32 : f32 to vector<1x16xf32>
      %56 = arith.mulf %55, %54 : vector<1x16xf32>
      %57 = arith.subf %5, %56 : vector<1x16xf32>
      %c0_33 = arith.constant 0 : index
      %c0_34 = arith.constant 0 : index
      %58 = vector.load %arg6[%c0_33, %c0_34] : memref<1x16xf32, #tpu.memory_space<vmem>>, vector<1x16xf32>
      tpu.vector_store %arg6[%c0_33, %c0_34], %57 {strides = array<i32>} : memref<1x16xf32, #tpu.memory_space<vmem>>, vector<1x16xf32>,
    } else {
    }
    return
  }
  func.func @transform_0(%arg0: i32) -> (i32, i32) {
    %c0_i32 = arith.constant 0 : i32
    %c0_i32_0 = arith.constant 0 : i32
    return %arg0, %c0_i32 : i32, i32
  }
  func.func @transform_1(%arg0: i32) -> (i32, i32) {
    %c0_i32 = arith.constant 0 : i32
    %c0_i32_0 = arith.constant 0 : i32
    %c0_i32_1 = arith.constant 0 : i32
    return %c0_i32, %c0_i32_0 : i32, i32
  }
  func.func @transform_2(%arg0: i32) -> (i32, i32) {
    %c0_i32 = arith.constant 0 : i32
    %c0_i32_0 = arith.constant 0 : i32
    %c0_i32_1 = arith.constant 0 : i32
    return %c0_i32, %c0_i32_0 : i32, i32
  }
  func.func @transform_3(%arg0: i32) -> (i32, i32) {
    %c0_i32 = arith.constant 0 : i32
    %c0_i32_0 = arith.constant 0 : i32
    return %arg0, %c0_i32 : i32, i32
  }
  func.func @transform_4(%arg0: i32) -> (i32, i32) {
    %c0_i32 = arith.constant 0 : i32
    %c0_i32_0 = arith.constant 0 : i32
    %c0_i32_1 = arith.constant 0 : i32
    return %c0_i32, %c0_i32_0 : i32, i32
  }
  func.func @transform_5(%arg0: i32) -> (i32, i32) {
    %c0_i32 = arith.constant 0 : i32
    %c0_i32_0 = arith.constant 0 : i32
    %c0_i32_1 = arith.constant 0 : i32
    return %c0_i32, %c0_i32_0 : i32, i32
  }
}

</mosaic_0001>

<llo_original>
// kernel: tent_step.1
$region0: #{tent_step.1}
  #allocation0 [shape = 'u32[]', space=smem, size = 0x4, offset = 0x4, fixed_abs, tag = 'smem constant byte address 0x4 - core index']
  #allocation1 [shape = 'u32[72,128]{1,0:T(1,128)}', space=vmem, size = 0x9000, scoped, tag = 'internal scratch']
  #allocation2 [shape = 'f32[16,1024]{1,0:T(8,128)}', space=vmem, size = 0x10000, scoped, tag = 'scratch operand']
  #allocation3 [shape = 'f32[1,16]{1,0:T(1,128)}', space=vmem, size = 0x200, scoped, tag = 'scratch operand']
  %s0 = inlined_call_operand.hbm [shape: bf16[2,1024], index: 0, kind: input, shape index: {}]
  %s1 = inlined_call_operand.hbm [shape: f32[16,1024], index: 1, kind: input, shape index: {}, may-alias: {1,4}]
  %s2 = inlined_call_operand.hbm [shape: f32[1,16], index: 2, kind: input, shape index: {}, may-alias: {2,5}]
  %s3 = inlined_call_operand.hbm [shape: f32[2,16], index: 3, kind: output, shape index: {0}]
  %s4 = inlined_call_operand.hbm [shape: f32[16,1024], index: 4, kind: output, shape index: {1}, may-alias: {1,4}]
  %s5 = inlined_call_operand.hbm [shape: f32[1,16], index: 5, kind: output, shape index: {2}, may-alias: {2,5}]
  %6 = xla_tuple %s3, %s4, %s5
  %s7 = sld [smem:[#allocation0]]
  $region58: #{tent_step.1} parent=0
    _
  %s9 = ssub.s32 1, %s7
  %s10 = scalar_select 0, %s9, %s7
  $region1: #{tent_step.1} parent=0
    #allocation4 [shape = 'u8[4096]{0}', space=vmem, size = 0x1000, scoped, tag = 'input window, operand 0, single buffered']
    #allocation5 [shape = 's32[1]{0}', space=sflag, size = 0x4, scoped, tag = 'scoped memory for tent_step.1']
    #allocation6 [shape = 's32[1]{0}', space=sflag, size = 0x4, scoped, tag = 'scoped memory for tent_step.1']
    #allocation7 [shape = 'u8[65536]{0}', space=vmem, size = 0x10000, scoped, tag = 'input window, operand 1, single buffered']
    #allocation8 [shape = 's32[1]{0}', space=sflag, size = 0x4, scoped, tag = 'scoped memory for tent_step.1']
    #allocation9 [shape = 'u8[512]{0}', space=vmem, size = 0x400, scoped, tag = 'input window, operand 2, single buffered']
    #allocation10 [shape = 'u8[1024]{0}', space=vmem, size = 0x400, scoped, tag = 'output window, operand 0, single buffered']
    #allocation11 [shape = 'u8[65536]{0}', space=vmem, size = 0x10000, scoped, tag = 'output window, operand 1, single buffered']
    #allocation12 [shape = 's32[1]{0}', space=sflag, size = 0x4, scoped, tag = 'scoped memory for tent_step.1']
    #allocation13 [shape = 'u8[512]{0}', space=vmem, size = 0x400, scoped, tag = 'output window, operand 2, single buffered']
    %11 = vsyncpa [#allocation5], 0
    %12 = vsyncpa [#allocation8], 0
    %13 = vsyncpa [#allocation6], 0
    %14 = vsyncpa [#allocation12], 0
    // Predicated region
    $region2: #{tent_step.1} parent=1 // pred_check
      _
    $region3: #{tent_step.1} parent=1 // pred_check_branch
      %16 = sbr.rel (0) target = $region5
    $region4: #{tent_step.1} parent=1 // pred_region
      %18 = vsyncadd [#allocation5], 0
      %s20 = sshll.u32 %s0, 4
      %s21 = int_to_ptr.hbm [resolvable:$true] %s20
      %s22 = sshll.u32 [#allocation4], 4
      %s23 = int_to_ptr.vmem [resolvable:$true] %s22
      %25 = dma.hbm_to_vmem [thread:$0]  %s21, 128, %s23, [#allocation5]
    $region5: #{tent_step.1} parent=1 // pred_fallthru
      _
    // Predicated region
    $region6: #{tent_step.1} parent=1 // pred_check
      _
    $region7: #{tent_step.1} parent=1 // pred_check_branch
      %27 = sbr.rel (0) target = $region9
    $region8: #{tent_step.1} parent=1 // pred_region
      %29 = vsyncadd [#allocation8], 0
      %s30 = sshll.u32 %s1, 4
      %s31 = int_to_ptr.hbm [resolvable:$true] %s30
      %s32 = sshll.u32 [#allocation7], 4
      %s33 = int_to_ptr.vmem [resolvable:$true] %s32
      %38 = dma.hbm_to_vmem [thread:$0]  %s31, 2048, %s33, [#allocation8], 1024, 1024, 64
    $region9: #{tent_step.1} parent=1 // pred_fallthru
      _
    // Predicated region
    $region10: #{tent_step.1} parent=1 // pred_check
      _
    $region11: #{tent_step.1} parent=1 // pred_check_branch
      %40 = sbr.rel (0) target = $region13
    $region12: #{tent_step.1} parent=1 // pred_region
      %42 = vsyncadd [#allocation8], 0
      %s44 = sshll.u32 %s2, 4
      %s45 = int_to_ptr.hbm [resolvable:$true] %s44
      %s46 = sshll.u32 [#allocation9], 4
      %s47 = int_to_ptr.vmem [resolvable:$true] %s46
      %49 = dma.hbm_to_vmem [thread:$0]  %s45, 16, %s47, [#allocation8]
    $region13: #{tent_step.1} parent=1 // pred_fallthru
      _
    // Predicated region
    $region14: #{tent_step.1} parent=1 // pred_check
      _
    $region15: #{tent_step.1} parent=1 // pred_check_branch
      %51 = sbr.rel (0) target = $region17
    $region16: #{tent_step.1} parent=1 // pred_region
      %53 = dma.done [#allocation5], 128
    $region17: #{tent_step.1} parent=1 // pred_fallthru
      _
    // Predicated region
    $region18: #{tent_step.1} parent=1 // pred_check
      _
    $region19: #{tent_step.1} parent=1 // pred_check_branch
      %55 = sbr.rel (0) target = $region21
    $region20: #{tent_step.1} parent=1 // pred_region
      %57 = dma.done [#allocation8], 2048
    $region21: #{tent_step.1} parent=1 // pred_fallthru
      _
    // Predicated region
    $region22: #{tent_step.1} parent=1 // pred_check
      _
    $region23: #{tent_step.1} parent=1 // pred_check_branch
      %59 = sbr.rel (0) target = $region25
    $region24: #{tent_step.1} parent=1 // pred_region
      %61 = dma.done [#allocation8], 16
    $region25: #{tent_step.1} parent=1 // pred_fallthru
      _
    %p63 = scmp.eq.s32.totalorder 0, 0
    // Predicated region
    $region26: #{tent_step.1} parent=1 // pred_check
      %p64 = pneg %p63
    $region27: #{tent_step.1} parent=1 // pred_check_branch
      %66 = sbr.rel (%p64) target = $region29
    $region28: #{tent_step.1} parent=1 // pred_region
      %67 = vst [vmem:[#allocation2] sm:$0xff] 0.0
      %68 = vst [vmem:[#allocation2 + $0x8] sm:$0xff] 0.0
      %69 = vst [vmem:[#allocation2 + $0x10] sm:$0xff] 0.0
      %70 = vst [vmem:[#allocation2 + $0x18] sm:$0xff] 0.0
      %71 = vst [vmem:[#allocation2 + $0x20] sm:$0xff] 0.0
      %72 = vst [vmem:[#allocation2 + $0x28] sm:$0xff] 0.0
      %73 = vst [vmem:[#allocation2 + $0x30] sm:$0xff] 0.0
      %74 = vst [vmem:[#allocation2 + $0x38] sm:$0xff] 0.0
      %75 = vst [vmem:[#allocation2 + $0x40] sm:$0xff] 0.0
      %76 = vst [vmem:[#allocation2 + $0x48] sm:$0xff] 0.0
      %77 = vst [vmem:[#allocation2 + $0x50] sm:$0xff] 0.0
      %78 = vst [vmem:[#allocation2 + $0x58] sm:$0xff] 0.0
      %79 = vst [vmem:[#allocation2 + $0x60] sm:$0xff] 0.0
      %80 = vst [vmem:[#allocation2 + $0x68] sm:$0xff] 0.0
      %81 = vst [vmem:[#allocation2 + $0x70] sm:$0xff] 0.0
      %82 = vst [vmem:[#allocation2 + $0x78] sm:$0xff] 0.0
      %vm83 = vcmask 122880
      %84 = vst.msk [vmem:[#allocation3] sm:$0x1] %vm83, 0.0
    $region29: #{tent_step.1} parent=1 // pred_fallthru
      _
    %v85 = vld [vmem:[#allocation4] sm:$0xff]
    %v86 = vld [vmem:[#allocation7] sm:$0xff]
    %v87 = vld [vmem:[#allocation7 + $0x8] sm:$0xff]
    %v88 = vld [vmem:[#allocation7 + $0x10] sm:$0xff]
    %v89 = vld [vmem:[#allocation7 + $0x18] sm:$0xff]
    %v90 = vld [vmem:[#allocation7 + $0x20] sm:$0xff]
    %v91 = vld [vmem:[#allocation7 + $0x28] sm:$0xff]
    %v92 = vld [vmem:[#allocation7 + $0x30] sm:$0xff]
    %v93 = vld [vmem:[#allocation7 + $0x38] sm:$0xff]
    %v94 = vld [vmem:[#allocation7 + $0x40] sm:$0xff]
    %v95 = vld [vmem:[#allocation7 + $0x48] sm:$0xff]
    %v96 = vld [vmem:[#allocation7 + $0x50] sm:$0xff]
    %v97 = vld [vmem:[#allocation7 + $0x58] sm:$0xff]
    %v98 = vld [vmem:[#allocation7 + $0x60] sm:$0xff]
    %v99 = vld [vmem:[#allocation7 + $0x68] sm:$0xff]
    %v100 = vld [vmem:[#allocation7 + $0x70] sm:$0xff]
    %v101 = vld [vmem:[#allocation7 + $0x78] sm:$0xff]
    %v102 = vld [vmem:[#allocation9] sm:$0x1]
    %v103 = vpack.c.bf16 %v94, %v86
    %v104 = vpack.c.bf16 %v95, %v87
    %v105 = vpack.c.bf16 %v96, %v88
    %v106 = vpack.c.bf16 %v97, %v89
    %v107 = vpack.c.bf16 %v98, %v90
    %v108 = vpack.c.bf16 %v99, %v91
    %v109 = vpack.c.bf16 %v100, %v92
    %v110 = vpack.c.bf16 %v101, %v93
    %v112 = vperm.slane %v102, 0
    %115 = vst [vmem:[#allocation1] ss:$9 sm:$0xff] %v85
    %v116 = vld [vmem:[#allocation1] sm:$0xff]
    %v117 = vld [vmem:[#allocation1 + $0x9] sm:$0xff]
    %v118 = vld [vmem:[#allocation1 + $0x12] sm:$0xff]
    %v119 = vld [vmem:[#allocation1 + $0x1b] sm:$0xff]
    %v120 = vld [vmem:[#allocation1 + $0x24] sm:$0xff]
    %v121 = vld [vmem:[#allocation1 + $0x2d] sm:$0xff]
    %v122 = vld [vmem:[#allocation1 + $0x36] sm:$0xff]
    %v123 = vld [vmem:[#allocation1 + $0x3f] sm:$0xff]
    %132 = vmatpush.bf16.xpose.msra.mxu0 0
    %133 = vmatpush.bf16.xpose.msra.mxu0 0
    %134 = vmatpush.bf16.xpose.msra.mxu0 0
    %135 = vmatpush.bf16.xpose.msra.mxu0 0
    %136 = vmatpush.bf16.xpose.msra.mxu0 0
    %137 = vmatpush.bf16.xpose.msra.mxu0 0
    %138 = vmatpush.bf16.xpose.msra.mxu0 0
    %139 = vmatpush.bf16.xpose.msra.mxu0 %v103
    %140 = vmatmul.bf16.gmra.mxu0 %v116
    %v141 = vpop.f32.mrf.mxu0
    %v142 = vadd.f32 %v112, %v141
    %v143 = vpop.f32.mrf.mxu0
    %144 = vdwg.mxu0
    %145 = vmatpush.bf16.xpose.msra.mxu0 0
    %146 = vmatpush.bf16.xpose.msra.mxu0 0
    %147 = vmatpush.bf16.xpose.msra.mxu0 0
    %148 = vmatpush.bf16.xpose.msra.mxu0 0
    %149 = vmatpush.bf16.xpose.msra.mxu0 0
    %150 = vmatpush.bf16.xpose.msra.mxu0 0
    %151 = vmatpush.bf16.xpose.msra.mxu0 0
    %152 = vmatpush.bf16.xpose.msra.mxu0 %v104
    %153 = vmatmul.bf16.gmra.mxu0 %v117
    %v154 = vpop.f32.mrf.mxu0
    %v155 = vadd.f32 %v142, %v154
    %v156 = vpop.f32.mrf.mxu0
    %157 = vdwg.mxu0
    %158 = vmatpush.bf16.xpose.msra.mxu0 0
    %159 = vmatpush.bf16.xpose.msra.mxu0 0
    %160 = vmatpush.bf16.xpose.msra.mxu0 0
    %161 = vmatpush.bf16.xpose.msra.mxu0 0
    %162 = vmatpush.bf16.xpose.msra.mxu0 0
    %163 = vmatpush.bf16.xpose.msra.mxu0 0
    %164 = vmatpush.bf16.xpose.msra.mxu0 0
    %165 = vmatpush.bf16.xpose.msra.mxu0 %v105
    %166 = vmatmul.bf16.gmra.mxu0 %v118
    %v167 = vpop.f32.mrf.mxu0
    %v168 = vadd.f32 %v155, %v167
    %v169 = vpop.f32.mrf.mxu0
    %170 = vdwg.mxu0
    %171 = vmatpush.bf16.xpose.msra.mxu0 0
    %172 = vmatpush.bf16.xpose.msra.mxu0 0
    %173 = vmatpush.bf16.xpose.msra.mxu0 0
    %174 = vmatpush.bf16.xpose.msra.mxu0 0
    %175 = vmatpush.bf16.xpose.msra.mxu0 0
    %176 = vmatpush.bf16.xpose.msra.mxu0 0
    %177 = vmatpush.bf16.xpose.msra.mxu0 0
    %178 = vmatpush.bf16.xpose.msra.mxu0 %v106
    %179 = vmatmul.bf16.gmra.mxu0 %v119
    %v180 = vpop.f32.mrf.mxu0
    %v181 = vadd.f32 %v168, %v180
    %v182 = vpop.f32.mrf.mxu0
    %183 = vdwg.mxu0
    %184 = vmatpush.bf16.xpose.msra.mxu0 0
    %185 = vmatpush.bf16.xpose.msra.mxu0 0
    %186 = vmatpush.bf16.xpose.msra.mxu0 0
    %187 = vmatpush.bf16.xpose.msra.mxu0 0
    %188 = vmatpush.bf16.xpose.msra.mxu0 0
    %189 = vmatpush.bf16.xpose.msra.mxu0 0
    %190 = vmatpush.bf16.xpose.msra.mxu0 0
    %191 = vmatpush.bf16.xpose.msra.mxu0 %v107
    %192 = vmatmul.bf16.gmra.mxu0 %v120
    %v193 = vpop.f32.mrf.mxu0
    %v194 = vadd.f32 %v181, %v193
    %v195 = vpop.f32.mrf.mxu0
    %196 = vdwg.mxu0
    %197 = vmatpush.bf16.xpose.msra.mxu0 0
    %198 = vmatpush.bf16.xpose.msra.mxu0 0
    %199 = vmatpush.bf16.xpose.msra.mxu0 0
    %200 = vmatpush.bf16.xpose.msra.mxu0 0
    %201 = vmatpush.bf16.xpose.msra.mxu0 0
    %202 = vmatpush.bf16.xpose.msra.mxu0 0
    %203 = vmatpush.bf16.xpose.msra.mxu0 0
    %204 = vmatpush.bf16.xpose.msra.mxu0 %v108
    %205 = vmatmul.bf16.gmra.mxu0 %v121
    %v206 = vpop.f32.mrf.mxu0
    %v207 = vadd.f32 %v194, %v206
    %v208 = vpop.f32.mrf.mxu0
    %209 = vdwg.mxu0
    %210 = vmatpush.bf16.xpose.msra.mxu0 0
    %211 = vmatpush.bf16.xpose.msra.mxu0 0
    %212 = vmatpush.bf16.xpose.msra.mxu0 0
    %213 = vmatpush.bf16.xpose.msra.mxu0 0
    %214 = vmatpush.bf16.xpose.msra.mxu0 0
    %215 = vmatpush.bf16.xpose.msra.mxu0 0
    %216 = vmatpush.bf16.xpose.msra.mxu0 0
    %217 = vmatpush.bf16.xpose.msra.mxu0 %v109
    %218 = vmatmul.bf16.gmra.mxu0 %v122
    %v219 = vpop.f32.mrf.mxu0
    %v220 = vadd.f32 %v207, %v219
    %v221 = vpop.f32.mrf.mxu0
    %222 = vdwg.mxu0
    %223 = vmatpush.bf16.xpose.msra.mxu0 0
    %224 = vmatpush.bf16.xpose.msra.mxu0 0
    %225 = vmatpush.bf16.xpose.msra.mxu0 0
    %226 = vmatpush.bf16.xpose.msra.mxu0 0
    %227 = vmatpush.bf16.xpose.msra.mxu0 0
    %228 = vmatpush.bf16.xpose.msra.mxu0 0
    %229 = vmatpush.bf16.xpose.msra.mxu0 0
    %230 = vmatpush.bf16.xpose.msra.mxu0 %v110
    %231 = vmatmul.bf16.gmra.mxu0 %v123
    %v232 = vpop.f32.mrf.mxu0
    %v233 = vadd.f32 %v220, %v232
    %v234 = vpop.f32.mrf.mxu0
    %235 = vdwg.mxu0
    %vm236 = vcmask 123904
    %v237 = vsel %vm236, %v233, -inf
    %238 = vmax.xlane.f32.xlu0 %v237
    %v239 = vpop.xlane.xlu0 %238
    %v240 = vsub.f32 %v233, %v239
    %v241 = vmul.f32 %v240, 1.442695
    %v242 = vpow.pop %v241
    %v243 = vsel %vm236, %v242, 0.0
    %244 = vadd.xlane.f32.xlu0 %v243
    %v245 = vpop.xlane.xlu0 %244
    %v246 = vrcp.pop %v245
    %v247 = vmul.f32 %v242, %v246
    %v248 = vlog2.pop %v245
    %v249 = vmul.f32 %v248, 0.6931472
    %v250 = vsub.f32 %v240, %v249
    %v251 = vmul.f32 %v247, %v250
    %v252 = vsel %vm236, %v251, 0.0
    %253 = vadd.xlane.f32.xlu0 %v252
    %v254 = vpop.xlane.xlu0 %253
    %v255 = vsub.f32 0.0, %v254
    %v256 = vadd.f32 %v250, %v255
    %v257 = vmul.f32 %v247, %v256
    %v258 = vmul.f32 %v257, -0.5
    %v259 = vld [vmem:[#allocation2] sm:$0xff]
    %v260 = vld [vmem:[#allocation2 + $0x8] sm:$0xff]
    %v261 = vld [vmem:[#allocation2 + $0x10] sm:$0xff]
    %v262 = vld [vmem:[#allocation2 + $0x18] sm:$0xff]
    %v263 = vld [vmem:[#allocation2 + $0x20] sm:$0xff]
    %v264 = vld [vmem:[#allocation2 + $0x28] sm:$0xff]
    %v265 = vld [vmem:[#allocation2 + $0x30] sm:$0xff]
    %v266 = vld [vmem:[#allocation2 + $0x38] sm:$0xff]
    %v267 = vld [vmem:[#allocation2 + $0x40] sm:$0xff]
    %v268 = vld [vmem:[#allocation2 + $0x48] sm:$0xff]
    %v269 = vld [vmem:[#allocation2 + $0x50] sm:$0xff]
    %v270 = vld [vmem:[#allocation2 + $0x58] sm:$0xff]
    %v271 = vld [vmem:[#allocation2 + $0x60] sm:$0xff]
    %v272 = vld [vmem:[#allocation2 + $0x68] sm:$0xff]
    %v273 = vld [vmem:[#allocation2 + $0x70] sm:$0xff]
    %v274 = vld [vmem:[#allocation2 + $0x78] sm:$0xff]
    %v275 = vpack.c.bf16 %v258, %v258
    %276 = vxpose.xlu0.c.b16.start [1/8] %v275, 128
    %277 = vxpose.xlu0.c.b16.cont [2/8] 0, 128
    %278 = vxpose.xlu0.c.b16.cont [3/8] 0, 128
    %279 = vxpose.xlu0.c.b16.cont [4/8] 0, 128
    %280 = vxpose.xlu0.c.b16.cont [5/8] 0, 128
    %281 = vxpose.xlu0.c.b16.cont [6/8] 0, 128
    %282 = vxpose.xlu0.c.b16.cont [7/8] 0, 128
    %283 = vxpose.xlu0.c.b16.end [8/8] 0, 128
    %v284 = vpop.trf.xlu0
    %v285 = vpop.trf.xlu0
    %v286 = vpop.trf.xlu0
    %v287 = vpop.trf.xlu0
    %v288 = vpop.trf.xlu0
    %v289 = vpop.trf.xlu0
    %v290 = vpop.trf.xlu0
    %v291 = vpop.trf.xlu0
    %292 = vst [vmem:[#allocation1] ss:$9 sm:$0xff] %v85
    %v293 = vld [vmem:[#allocation1] sm:$0xff]
    %v294 = vld [vmem:[#allocation1 + $0x9] sm:$0xff]
    %v295 = vld [vmem:[#allocation1 + $0x12] sm:$0xff]
    %v296 = vld [vmem:[#allocation1 + $0x1b] sm:$0xff]
    %v297 = vld [vmem:[#allocation1 + $0x24] sm:$0xff]
    %v298 = vld [vmem:[#allocation1 + $0x2d] sm:$0xff]
    %v299 = vld [vmem:[#allocation1 + $0x36] sm:$0xff]
    %v300 = vld [vmem:[#allocation1 + $0x3f] sm:$0xff]
    %vm301 = vcmask 15360
    %v303 = vsel %vm301, %v284, 0
    %vm305 = vcmask 1040384
    %v306 = vsel %vm305, %v293, 0
    %v308 = vsel %vm305, %v294, 0
    %v310 = vsel %vm305, %v295, 0
    %v312 = vsel %vm305, %v296, 0
    %v314 = vsel %vm305, %v297, 0
    %v316 = vsel %vm305, %v298, 0
    %v318 = vsel %vm305, %v299, 0
    %v320 = vsel %vm305, %v300, 0
    %322 = vmatpush.bf16.msra.mxu0 0
    %323 = vmatpush.bf16.msra.mxu0 0
    %324 = vmatpush.bf16.msra.mxu0 0
    %325 = vmatpush.bf16.msra.mxu0 0
    %326 = vmatpush.bf16.msra.mxu0 0
    %327 = vmatpush.bf16.msra.mxu0 0
    %328 = vmatpush.bf16.msra.mxu0 0
    %329 = vmatpush.bf16.msra.mxu0 %v306
    %330 = vmatmul.bf16.gmra.mxu0 %v303
    %v331 = vpop.f32.mrf.mxu0
    %v332 = vadd.f32 0.0, %v331
    %v333 = vpop.f32.mrf.mxu0
    %v334 = vadd.f32 0.0, %v333
    %335 = vdwg.mxu0
    %336 = vmatpush.bf16.msra.mxu0 0
    %337 = vmatpush.bf16.msra.mxu0 0
    %338 = vmatpush.bf16.msra.mxu0 0
    %339 = vmatpush.bf16.msra.mxu0 0
    %340 = vmatpush.bf16.msra.mxu0 0
    %341 = vmatpush.bf16.msra.mxu0 0
    %342 = vmatpush.bf16.msra.mxu0 0
    %343 = vmatpush.bf16.msra.mxu0 %v308
    %344 = vmatmul.bf16.gmra.mxu0 %v303
    %v345 = vpop.f32.mrf.mxu0
    %v346 = vadd.f32 0.0, %v345
    %v347 = vpop.f32.mrf.mxu0
    %v348 = vadd.f32 0.0, %v347
    %349 = vdwg.mxu0
    %350 = vmatpush.bf16.msra.mxu0 0
    %351 = vmatpush.bf16.msra.mxu0 0
    %352 = vmatpush.bf16.msra.mxu0 0
    %353 = vmatpush.bf16.msra.mxu0 0
    %354 = vmatpush.bf16.msra.mxu0 0
    %355 = vmatpush.bf16.msra.mxu0 0
    %356 = vmatpush.bf16.msra.mxu0 0
    %357 = vmatpush.bf16.msra.mxu0 %v310
    %358 = vmatmul.bf16.gmra.mxu0 %v303
    %v359 = vpop.f32.mrf.mxu0
    %v360 = vadd.f32 0.0, %v359
    %v361 = vpop.f32.mrf.mxu0
    %v362 = vadd.f32 0.0, %v361
    %363 = vdwg.mxu0
    %364 = vmatpush.bf16.msra.mxu0 0
    %365 = vmatpush.bf16.msra.mxu0 0
    %366 = vmatpush.bf16.msra.mxu0 0
    %367 = vmatpush.bf16.msra.mxu0 0
    %368 = vmatpush.bf16.msra.mxu0 0
    %369 = vmatpush.bf16.msra.mxu0 0
    %370 = vmatpush.bf16.msra.mxu0 0
    %371 = vmatpush.bf16.msra.mxu0 %v312
    %372 = vmatmul.bf16.gmra.mxu0 %v303
    %v373 = vpop.f32.mrf.mxu0
    %v374 = vadd.f32 0.0, %v373
    %v375 = vpop.f32.mrf.mxu0
    %v376 = vadd.f32 0.0, %v375
    %377 = vdwg.mxu0
    %378 = vmatpush.bf16.msra.mxu0 0
    %379 = vmatpush.bf16.msra.mxu0 0
    %380 = vmatpush.bf16.msra.mxu0 0
    %381 = vmatpush.bf16.msra.mxu0 0
    %382 = vmatpush.bf16.msra.mxu0 0
    %383 = vmatpush.bf16.msra.mxu0 0
    %384 = vmatpush.bf16.msra.mxu0 0
    %385 = vmatpush.bf16.msra.mxu0 %v314
    %386 = vmatmul.bf16.gmra.mxu0 %v303
    %v387 = vpop.f32.mrf.mxu0
    %v388 = vadd.f32 0.0, %v387
    %v389 = vpop.f32.mrf.mxu0
    %v390 = vadd.f32 0.0, %v389
    %391 = vdwg.mxu0
    %392 = vmatpush.bf16.msra.mxu0 0
    %393 = vmatpush.bf16.msra.mxu0 0
    %394 = vmatpush.bf16.msra.mxu0 0
    %395 = vmatpush.bf16.msra.mxu0 0
    %396 = vmatpush.bf16.msra.mxu0 0
    %397 = vmatpush.bf16.msra.mxu0 0
    %398 = vmatpush.bf16.msra.mxu0 0
    %399 = vmatpush.bf16.msra.mxu0 %v316
    %400 = vmatmul.bf16.gmra.mxu0 %v303
    %v401 = vpop.f32.mrf.mxu0
    %v402 = vadd.f32 0.0, %v401
    %v403 = vpop.f32.mrf.mxu0
    %v404 = vadd.f32 0.0, %v403
    %405 = vdwg.mxu0
    %406 = vmatpush.bf16.msra.mxu0 0
    %407 = vmatpush.bf16.msra.mxu0 0
    %408 = vmatpush.bf16.msra.mxu0 0
    %409 = vmatpush.bf16.msra.mxu0 0
    %410 = vmatpush.bf16.msra.mxu0 0
    %411 = vmatpush.bf16.msra.mxu0 0
    %412 = vmatpush.bf16.msra.mxu0 0
    %413 = vmatpush.bf16.msra.mxu0 %v318
    %414 = vmatmul.bf16.gmra.mxu0 %v303
    %v415 = vpop.f32.mrf.mxu0
    %v416 = vadd.f32 0.0, %v415
    %v417 = vpop.f32.mrf.mxu0
    %v418 = vadd.f32 0.0, %v417
    %419 = vdwg.mxu0
    %420 = vmatpush.bf16.msra.mxu0 0
    %421 = vmatpush.bf16.msra.mxu0 0
    %422 = vmatpush.bf16.msra.mxu0 0
    %423 = vmatpush.bf16.msra.mxu0 0
    %424 = vmatpush.bf16.msra.mxu0 0
    %425 = vmatpush.bf16.msra.mxu0 0
    %426 = vmatpush.bf16.msra.mxu0 0
    %427 = vmatpush.bf16.msra.mxu0 %v320
    %428 = vmatmul.bf16.gmra.mxu0 %v303
    %v429 = vpop.f32.mrf.mxu0
    %v430 = vadd.f32 0.0, %v429
    %v431 = vpop.f32.mrf.mxu0
    %v432 = vadd.f32 0.0, %v431
    %433 = vdwg.mxu0
    %v434 = vadd.f32 %v259, %v332
    %v435 = vadd.f32 %v260, %v346
    %v436 = vadd.f32 %v261, %v360
    %v437 = vadd.f32 %v262, %v374
    %v438 = vadd.f32 %v263, %v388
    %v439 = vadd.f32 %v264, %v402
    %v440 = vadd.f32 %v265, %v416
    %v441 = vadd.f32 %v266, %v430
    %v442 = vadd.f32 %v267, %v334
    %v443 = vadd.f32 %v268, %v348
    %v444 = vadd.f32 %v269, %v362
    %v445 = vadd.f32 %v270, %v376
    %v446 = vadd.f32 %v271, %v390
    %v447 = vadd.f32 %v272, %v404
    %v448 = vadd.f32 %v273, %v418
    %v449 = vadd.f32 %v274, %v432
    %450 = vst [vmem:[#allocation2] sm:$0xff] %v434
    %451 = vst [vmem:[#allocation2 + $0x8] sm:$0xff] %v435
    %452 = vst [vmem:[#allocation2 + $0x10] sm:$0xff] %v436
    %453 = vst [vmem:[#allocation2 + $0x18] sm:$0xff] %v437
    %454 = vst [vmem:[#allocation2 + $0x20] sm:$0xff] %v438
    %455 = vst [vmem:[#allocation2 + $0x28] sm:$0xff] %v439
    %456 = vst [vmem:[#allocation2 + $0x30] sm:$0xff] %v440
    %457 = vst [vmem:[#allocation2 + $0x38] sm:$0xff] %v441
    %458 = vst [vmem:[#allocation2 + $0x40] sm:$0xff] %v442
    %459 = vst [vmem:[#allocation2 + $0x48] sm:$0xff] %v443
    %460 = vst [vmem:[#allocation2 + $0x50] sm:$0xff] %v444
    %461 = vst [vmem:[#allocation2 + $0x58] sm:$0xff] %v445
    %462 = vst [vmem:[#allocation2 + $0x60] sm:$0xff] %v446
    %463 = vst [vmem:[#allocation2 + $0x68] sm:$0xff] %v447
    %464 = vst [vmem:[#allocation2 + $0x70] sm:$0xff] %v448
    %465 = vst [vmem:[#allocation2 + $0x78] sm:$0xff] %v449
    %v466 = vld [vmem:[#allocation3] sm:$0x1]
    %v467 = vsel %vm236, %v258, 0.0
    %v468 = vrot.slane %v467, 4
    %v469 = vadd.f32 %v467, %v468
    %v470 = vrot.slane %v469, 2
    %v471 = vadd.f32 %v469, %v470
    %v472 = vrot.slane %v471, 1
    %v473 = vadd.f32 %v471, %v472
    %v474 = vadd.f32 %v466, %v473
    %vm475 = vcmask 122880
    %476 = vst.msk [vmem:[#allocation3] sm:$0x1] %vm475, %v474
    %477 = vst.msk [vmem:[#allocation10] sm:$0x3] %vm236, %v233
    // Predicated region
    $region30: #{tent_step.1} parent=1 // pred_check
      %p478 = pneg %p63
    $region31: #{tent_step.1} parent=1 // pred_check_branch
      %480 = sbr.rel (%p478) target = $region33
    $region32: #{tent_step.1} parent=1 // pred_region
      %v481 = vld [vmem:[#allocation2] sm:$0xff]
      %v482 = vld [vmem:[#allocation2 + $0x8] sm:$0xff]
      %v483 = vld [vmem:[#allocation2 + $0x10] sm:$0xff]
      %v484 = vld [vmem:[#allocation2 + $0x18] sm:$0xff]
      %v485 = vld [vmem:[#allocation2 + $0x20] sm:$0xff]
      %v486 = vld [vmem:[#allocation2 + $0x28] sm:$0xff]
      %v487 = vld [vmem:[#allocation2 + $0x30] sm:$0xff]
      %v488 = vld [vmem:[#allocation2 + $0x38] sm:$0xff]
      %v489 = vld [vmem:[#allocation2 + $0x40] sm:$0xff]
      %v490 = vld [vmem:[#allocation2 + $0x48] sm:$0xff]
      %v491 = vld [vmem:[#allocation2 + $0x50] sm:$0xff]
      %v492 = vld [vmem:[#allocation2 + $0x58] sm:$0xff]
      %v493 = vld [vmem:[#allocation2 + $0x60] sm:$0xff]
      %v494 = vld [vmem:[#allocation2 + $0x68] sm:$0xff]
      %v495 = vld [vmem:[#allocation2 + $0x70] sm:$0xff]
      %v496 = vld [vmem:[#allocation2 + $0x78] sm:$0xff]
      %v497 = vmul.f32 %v481, 0.01
      %v498 = vmul.f32 %v482, 0.01
      %v499 = vmul.f32 %v483, 0.01
      %v500 = vmul.f32 %v484, 0.01
      %v501 = vmul.f32 %v485, 0.01
      %v502 = vmul.f32 %v486, 0.01
      %v503 = vmul.f32 %v487, 0.01
      %v504 = vmul.f32 %v488, 0.01
      %v505 = vmul.f32 %v489, 0.01
      %v506 = vmul.f32 %v490, 0.01
      %v507 = vmul.f32 %v491, 0.01
      %v508 = vmul.f32 %v492, 0.01
      %v509 = vmul.f32 %v493, 0.01
      %v510 = vmul.f32 %v494, 0.01
      %v511 = vmul.f32 %v495, 0.01
      %v512 = vmul.f32 %v496, 0.01
      %v513 = vsub.f32 %v86, %v497
      %v514 = vsub.f32 %v87, %v498
      %v515 = vsub.f32 %v88, %v499
      %v516 = vsub.f32 %v89, %v500
      %v517 = vsub.f32 %v90, %v501
      %v518 = vsub.f32 %v91, %v502
      %v519 = vsub.f32 %v92, %v503
      %v520 = vsub.f32 %v93, %v504
      %v521 = vsub.f32 %v94, %v505
      %v522 = vsub.f32 %v95, %v506
      %v523 = vsub.f32 %v96, %v507
      %v524 = vsub.f32 %v97, %v508
      %v525 = vsub.f32 %v98, %v509
      %v526 = vsub.f32 %v99, %v510
      %v527 = vsub.f32 %v100, %v511
      %v528 = vsub.f32 %v101, %v512
      %529 = vst [vmem:[#allocation11] sm:$0xff] %v513
      %530 = vst [vmem:[#allocation11 + $0x8] sm:$0xff] %v514
      %531 = vst [vmem:[#allocation11 + $0x10] sm:$0xff] %v515
      %532 = vst [vmem:[#allocation11 + $0x18] sm:$0xff] %v516
      %533 = vst [vmem:[#allocation11 + $0x20] sm:$0xff] %v517
      %534 = vst [vmem:[#allocation11 + $0x28] sm:$0xff] %v518
      %535 = vst [vmem:[#allocation11 + $0x30] sm:$0xff] %v519
      %536 = vst [vmem:[#allocation11 + $0x38] sm:$0xff] %v520
      %537 = vst [vmem:[#allocation11 + $0x40] sm:$0xff] %v521
      %538 = vst [vmem:[#allocation11 + $0x48] sm:$0xff] %v522
      %539 = vst [vmem:[#allocation11 + $0x50] sm:$0xff] %v523
      %540 = vst [vmem:[#allocation11 + $0x58] sm:$0xff] %v524
      %541 = vst [vmem:[#allocation11 + $0x60] sm:$0xff] %v525
      %542 = vst [vmem:[#allocation11 + $0x68] sm:$0xff] %v526
      %543 = vst [vmem:[#allocation11 + $0x70] sm:$0xff] %v527
      %544 = vst [vmem:[#allocation11 + $0x78] sm:$0xff] %v528
      %v545 = vld [vmem:[#allocation3] sm:$0x1]
      %v546 = vmul.f32 %v545, 0.01
      %v547 = vsub.f32 %v102, %v546
      %548 = vst.msk [vmem:[#allocation13] sm:$0x1] %vm475, %v547
    $region33: #{tent_step.1} parent=1 // pred_fallthru
      _
    // Predicated region
    $region34: #{tent_step.1} parent=1 // pred_check
      _
    $region35: #{tent_step.1} parent=1 // pred_check_branch
      %550 = sbr.rel (0) target = $region37
    $region36: #{tent_step.1} parent=1 // pred_region
      %552 = vsyncadd [#allocation6], 0
      %s554 = sshll.u32 [#allocation10], 4
      %s555 = int_to_ptr.vmem [resolvable:$true] %s554
      %s556 = sshll.u32 %s3, 4
      %s557 = int_to_ptr.hbm [resolvable:$true] %s556
      %559 = dma.vmem_to_hbm [thread:$0]  %s555, 32, %s557, [#allocation6]
    $region37: #{tent_step.1} parent=1 // pred_fallthru
      _
    // Predicated region
    $region38: #{tent_step.1} parent=1 // pred_check
      _
    $region39: #{tent_step.1} parent=1 // pred_check_branch
      %561 = sbr.rel (0) target = $region41
    $region40: #{tent_step.1} parent=1 // pred_region
      %563 = vsyncadd [#allocation12], 0
      %s564 = sshll.u32 [#allocation11], 4
      %s565 = int_to_ptr.vmem [resolvable:$true] %s564
      %s566 = sshll.u32 %s4, 4
      %s567 = int_to_ptr.hbm [resolvable:$true] %s566
      %572 = dma.vmem_to_hbm [thread:$0]  %s565, 2048, %s567, [#allocation12], 1024, 1024, 64
    $region41: #{tent_step.1} parent=1 // pred_fallthru
      _
    // Predicated region
    $region42: #{tent_step.1} parent=1 // pred_check
      _
    $region43: #{tent_step.1} parent=1 // pred_check_branch
      %574 = sbr.rel (0) target = $region45
    $region44: #{tent_step.1} parent=1 // pred_region
      %576 = vsyncadd [#allocation12], 0
      %s578 = sshll.u32 [#allocation13], 4
      %s579 = int_to_ptr.vmem [resolvable:$true] %s578
      %s580 = sshll.u32 %s5, 4
      %s581 = int_to_ptr.hbm [resolvable:$true] %s580
      %583 = dma.vmem_to_hbm [thread:$0]  %s579, 16, %s581, [#allocation12]
    $region45: #{tent_step.1} parent=1 // pred_fallthru
      _
    // Predicated region
    $region46: #{tent_step.1} parent=1 // pred_check
      _
    $region47: #{tent_step.1} parent=1 // pred_check_branch
      %585 = sbr.rel (0) target = $region49
    $region48: #{tent_step.1} parent=1 // pred_region
      %587 = dma.done [#allocation6], 32
    $region49: #{tent_step.1} parent=1 // pred_fallthru
      _
    // Predicated region
    $region50: #{tent_step.1} parent=1 // pred_check
      _
    $region51: #{tent_step.1} parent=1 // pred_check_branch
      %589 = sbr.rel (0) target = $region53
    $region52: #{tent_step.1} parent=1 // pred_region
      %591 = dma.done [#allocation12], 2048
    $region53: #{tent_step.1} parent=1 // pred_fallthru
      _
    // Predicated region
    $region54: #{tent_step.1} parent=1 // pred_check
      _
    $region55: #{tent_step.1} parent=1 // pred_check_branch
      %593 = sbr.rel (0) target = $region57
    $region56: #{tent_step.1} parent=1 // pred_region
      %595 = dma.done [#allocation12], 16
    $region57: #{tent_step.1} parent=1 // pred_fallthru
      _
    %596 = vsyncpa [#allocation5], 1
    %597 = vsyncpa [#allocation8], 1
    %598 = vsyncpa [#allocation6], 1
    %599 = vsyncpa [#allocation12], 1

</llo_original>
